<compile_context>
chip_gen: v7x
topology: tpu7x:2x2x1
jax: 0.10.0
libtpu: 0.0.40
codegen_flags: <defaults>
</compile_context>

<pallas_src>
import functools
import math

import jax
import jax.numpy as jnp
from jax.experimental import pallas as pl
from jax.experimental.pallas import tpu as pltpu


_CompilerParams = getattr(pltpu, "CompilerParams", None) or getattr(
    pltpu, "TPUCompilerParams", None)


def _compiler_params(**kwargs):
    if _CompilerParams is None:
        return None
    return _CompilerParams(**kwargs)


def _round_up(a, b):
    return (a + b - 1) // b * b


def _vmem_budgets():
    """Generation-aware (tile_budget_bytes, vmem_limit_bytes)."""
    try:
        cap = pltpu.get_tpu_info().vmem_capacity_bytes
    except Exception:
        cap = 128 * 1024 * 1024
    if cap <= 64 * 1024 * 1024:                      # v7x-class: 64 MiB physical VMEM
        return 24 * 1024 * 1024, 48 * 1024 * 1024
    return 56 * 1024 * 1024, 100 * 1024 * 1024       # v5e / v6e: 128 MiB VMEM


# -----------------------------------------------------------------------------
# Adapter kernels:  out = scale * (relu(x @ Wd + bd) @ Wu + bu) [+ residual]
#   - x arrives in its original dtype; cast to bf16 in-kernel right before the MXU
#   - f32 MXU accumulation; bias / ReLU / scale / residual epilogue in f32
#     (v5e VPU has no bf16); output cast to out_dtype (bf16 default) on store
#   - residual reuses the already-loaded x tile (no second HBM stream)
# -----------------------------------------------------------------------------
def _adapter_kernel(x_ref, wd_ref, bd_ref, wu_ref, bu_ref, o_ref, *,
                    scale, add_residual):
    x = x_ref[...]                                                   # (tile_n, d_model) f32
    xc = x.astype(wd_ref.dtype)                                      # in-kernel bf16 cast
    down = jnp.dot(xc, wd_ref[...], preferred_element_type=jnp.float32)
    down = jnp.maximum(down + bd_ref[...], 0.0)                      # ReLU; dropout p=0/eval
    up = jnp.dot(down.astype(wu_ref.dtype), wu_ref[...],
                 preferred_element_type=jnp.float32)
    up = (up + bu_ref[...]) * scale                                  # adapter_scalar='0.1'
    if add_residual:                                                 # residual defaults to x
        up = up + x.astype(jnp.float32)                              # exact f32 residual
    o_ref[...] = up.astype(o_ref.dtype)


def _adapter_kernel_res(x_ref, res_ref, wd_ref, bd_ref, wu_ref, bu_ref, o_ref, *,
                        scale):
    # Only used when a residual tensor different from x is explicitly supplied.
    x = x_ref[...]
    down = jnp.dot(x.astype(wd_ref.dtype), wd_ref[...],
                   preferred_element_type=jnp.float32)
    down = jnp.maximum(down + bd_ref[...], 0.0)
    up = jnp.dot(down.astype(wu_ref.dtype), wu_ref[...],
                 preferred_element_type=jnp.float32)
    up = (up + bu_ref[...]) * scale + res_ref[...].astype(jnp.float32)
    o_ref[...] = up.astype(o_ref.dtype)


def adapter_forward(x, w_down, b_down, w_up, b_up, *, scale=0.1,
                    add_residual=True, residual=None, tile_n=2048,
                    compute_dtype=jnp.bfloat16, out_dtype=jnp.bfloat16):
    """x: (N, d_model); w_down: (d_model, bottleneck); w_up: (bottleneck, d_model).

    Matches Adapter.forward semantics (adapter_layernorm_option='none',
    dropout identity at eval / p=0).  Output emitted in `out_dtype`.
    """
    n, d_model = x.shape
    bneck = w_down.shape[1]
    bneck_pad = _round_up(bneck, 128)       # lane-dense bottleneck; keep at 128 (HBM-bound)

    # Zero-pad Wd columns / bd / Wu rows.  Exact: relu(0 + 0) = 0 and the padded
    # (zero) rows of Wu contribute nothing.
    if bneck_pad != bneck:
        w_down = jnp.pad(w_down, ((0, 0), (0, bneck_pad - bneck)))
        b_down = jnp.pad(b_down, ((0, bneck_pad - bneck),))
        w_up = jnp.pad(w_up, ((0, bneck_pad - bneck), (0, 0)))

    wd = w_down.astype(compute_dtype)       # weights are tiny & resident: wrapper cast OK
    wu = w_up.astype(compute_dtype)
    bd = b_down.reshape(1, -1).astype(jnp.float32)
    bu = b_up.reshape(1, -1).astype(jnp.float32)

    separate_residual = add_residual and (residual is not None) and (residual is not x)

    # --- VMEM-budgeted tile_n (generation-aware) --------------------------------
    budget, vmem_limit = _vmem_budgets()
    x_item = jnp.dtype(x.dtype).itemsize
    w_item = jnp.dtype(compute_dtype).itemsize
    o_item = jnp.dtype(out_dtype).itemsize
    res_item = jnp.dtype(residual.dtype).itemsize if separate_residual else 0
    # Constant-index weight/bias blocks are still double-buffered by Pallas -> 2x.
    weight_bytes = 2 * (2 * d_model * bneck_pad * w_item + (bneck_pad + d_model) * 4)
    # per row: dbuf x-in, dbuf out, dbuf residual (if any), f32 'up' + bf16 cast of x,
    # plus the (row, bneck_pad) intermediate (f32 + compute dtype).
    per_row = (d_model * (2 * x_item + 2 * o_item + 2 * res_item + 4 + w_item)
               + bneck_pad * (4 + w_item))
    max_rows = max(8, ((budget - weight_bytes) // per_row) // 8 * 8)
    tile_n = int(max(8, min(tile_n, max_rows, _round_up(n, 8))))

    grid = (pl.cdiv(n, tile_n),)            # no padding of N; ragged last block is masked
    cparams = _compiler_params(dimension_semantics=("parallel",),
                               vmem_limit_bytes=vmem_limit)

    if separate_residual:
        out = pl.pallas_call(
            functools.partial(_adapter_kernel_res, scale=scale),
            out_shape=jax.ShapeDtypeStruct((n, d_model), out_dtype),
            grid=grid,
            in_specs=[
                pl.BlockSpec((tile_n, d_model), lambda i: (i, 0)),      # x tile (orig dtype)
                pl.BlockSpec((tile_n, d_model), lambda i: (i, 0)),      # residual tile
                pl.BlockSpec((d_model, bneck_pad), lambda i: (0, 0)),   # Wd (resident)
                pl.BlockSpec((1, bneck_pad), lambda i: (0, 0)),         # bd
                pl.BlockSpec((bneck_pad, d_model), lambda i: (0, 0)),   # Wu (resident)
                pl.BlockSpec((1, d_model), lambda i: (0, 0)),           # bu
            ],
            out_specs=pl.BlockSpec((tile_n, d_model), lambda i: (i, 0)),
            compiler_params=cparams,
        )(x, residual, wd, bd, wu, bu)
    else:
        out = pl.pallas_call(
            functools.partial(_adapter_kernel, scale=scale,
                              add_residual=add_residual),
            out_shape=jax.ShapeDtypeStruct((n, d_model), out_dtype),
            grid=grid,
            in_specs=[
                pl.BlockSpec((tile_n, d_model), lambda i: (i, 0)),      # x tile (also residual)
                pl.BlockSpec((d_model, bneck_pad), lambda i: (0, 0)),   # Wd (resident)
                pl.BlockSpec((1, bneck_pad), lambda i: (0, 0)),         # bd
                pl.BlockSpec((bneck_pad, d_model), lambda i: (0, 0)),   # Wu (resident)
                pl.BlockSpec((1, d_model), lambda i: (0, 0)),           # bu
            ],
            out_specs=pl.BlockSpec((tile_n, d_model), lambda i: (i, 0)),
            compiler_params=cparams,
        )(x, wd, bd, wu, bu)

    return out


# -----------------------------------------------------------------------------
# Logits head (tail of Base.forward):
#   text = w * text_features + (1 - w) * text_ft
#   img_n = normalize(image_embeds, -1) ; txt_n = normalize(text, -1)
#   sim_q2t = img_n @ txt_n.T ; sim_i2t = max over query dim ; logits = sim / temp
#
# (a) L-tiled text-prep kernel: blend + rsqrt-normalize + fold 1/temp, bf16 out.
# (b) (batch, L)-tiled logits kernel: image normalized once per batch block into a
#     bf16 scratch, then one lane-dense (tile_b*Q, D)@(D, tile_l) matmul + max.
# -----------------------------------------------------------------------------
def _text_prep_kernel(txt_ref, txtft_ref, o_ref, *, res_w, inv_temp):
    txt = res_w * txt_ref[...] + (1.0 - res_w) * txtft_ref[...]      # (tile_l, D) f32
    ssq = jnp.sum(txt * txt, axis=-1, keepdims=True)
    inv = jax.lax.rsqrt(jnp.maximum(ssq, 1e-24))                     # == 1/max(||t||, 1e-12)
    o_ref[...] = (txt * (inv * inv_temp)).astype(o_ref.dtype)        # 1/temp folded in


def _logits_kernel(img_ref, txtn_ref, o_ref, imgn_ref):
    # Normalize the image block once per batch tile (L axis is the inner grid axis).
    @pl.when(pl.program_id(1) == 0)
    def _():
        img = img_ref[...].astype(jnp.float32)                       # (tile_b, Q, D)
        ssq = jnp.sum(img * img, axis=-1, keepdims=True)
        img_n = img * jax.lax.rsqrt(jnp.maximum(ssq, 1e-24))         # F.normalize semantics
        tb, q, d = img.shape
        imgn_ref[...] = img_n.reshape(tb * q, d).astype(imgn_ref.dtype)

    sim = jnp.dot(imgn_ref[...], txtn_ref[...],
                  preferred_element_type=jnp.float32)                # (tile_b*Q, tile_l)
    tb, q, _ = img_ref.shape
    o_ref[...] = jnp.max(sim.reshape(tb, q, -1), axis=1)             # already scaled by 1/temp


def logits_head(image_embeds, text_features, text_ft, *, res_w=0.8, temp=0.07,
                tile_b=None, tile_l=512):
    B, Q, D = image_embeds.shape
    L, _ = text_features.shape
    L_pad = _round_up(L, 128)                     # lane-dense logits columns

    tf = text_features.astype(jnp.float32)
    tft = text_ft.astype(jnp.float32)
    if L_pad != L:                                # zero rows -> zero logits, sliced away
        tf = jnp.pad(tf, ((0, L_pad - L), (0, 0)))
        tft = jnp.pad(tft, ((0, L_pad - L), (0, 0)))

    # (a) L-tiled text blend / normalize / temp-scale (runs once, bf16 output).
    tile_lp = min(1024, L_pad)
    txt_n = pl.pallas_call(
        functools.partial(_text_prep_kernel, res_w=res_w, inv_temp=1.0 / temp),
        out_shape=jax.ShapeDtypeStruct((L_pad, D), jnp.bfloat16),
        grid=(pl.cdiv(L_pad, tile_lp),),
        in_specs=[pl.BlockSpec((tile_lp, D), lambda i: (i, 0)),
                  pl.BlockSpec((tile_lp, D), lambda i: (i, 0))],
        out_specs=pl.BlockSpec((tile_lp, D), lambda i: (i, 0)),
        compiler_params=_compiler_params(dimension_semantics=("parallel",)),
    )(tf, tft)

    # One-time transpose so the hot matmul is a plain (M, D)@(D, tile_l) with a
    # lane-dense L output and no transposed-RHS feed inside the loop.
    txt_t = jnp.transpose(txt_n)                  # (D, L_pad) bf16

    # (b) batch x L tiled similarity + max over the query dim.
    if tile_b is None:
        tile_b = 16 if B >= 16 else (8 if B >= 8 else B)
    tile_l = min(tile_l, L_pad)
    grid = (pl.cdiv(B, tile_b), pl.cdiv(L_pad, tile_l))

    logits = pl.pallas_call(
        _logits_kernel,
        out_shape=jax.ShapeDtypeStruct((B, L_pad), jnp.float32),
        grid=grid,
        in_specs=[
            pl.BlockSpec((tile_b, Q, D), lambda b, l: (b, 0, 0)),   # image_embeds tile
            pl.BlockSpec((D, tile_l), lambda b, l: (0, l)),         # pre-transposed text tile
        ],
        out_specs=pl.BlockSpec((tile_b, tile_l), lambda b, l: (b, l)),
        scratch_shapes=[pltpu.VMEM((tile_b * Q, D), jnp.bfloat16)], # normalized image cache
        compiler_params=_compiler_params(
            dimension_semantics=("parallel", "arbitrary")),
    )(image_embeds, txt_t)

    return logits[:, :L] if L_pad != L else logits


# -----------------------------------------------------------------------------
# Deterministic parameter init matching Adapter._reset_parameters (init='lora'):
#   kaiming_uniform_(down_proj.weight, a=sqrt(5)); zeros for up_proj.weight/biases.
# -----------------------------------------------------------------------------
def init_adapter_params(key, d_model, bottleneck):
    # PyTorch down_proj.weight shape (bottleneck, d_model); kaiming_uniform with
    # a=sqrt(5) -> bound = 1/sqrt(fan_in) = 1/sqrt(d_model).
    bound = 1.0 / math.sqrt(d_model)
    w_down_pt = jax.random.uniform(key, (bottleneck, d_model), jnp.float32,
                                   minval=-bound, maxval=bound)
    w_down = w_down_pt.T                              # kernel layout (d_model, bottleneck)
    b_down = jnp.zeros((bottleneck,), jnp.float32)
    w_up = jnp.zeros((bottleneck, d_model), jnp.float32)
    b_up = jnp.zeros((d_model,), jnp.float32)
    return w_down, b_down, w_up, b_up


if __name__ == "__main__":
    key = jax.random.PRNGKey(0)
    k1, k2, k3, k4, k5, k6 = jax.random.split(key, 6)

    # Small shapes consistent with the forward pass.
    d_model = 32       # visual transformer width
    bottleneck = 8     # config.adapter_dim
    seq, batch = 8, 2  # visual tokens (LND layout in the reference) -> flattened N
    B, Q, D, L = 2, 4, 32, 6   # batch, query tokens, hidden dim, #(attr,obj) pairs

    # --- Adapter (as used in encode_image_with_adapter: add_residual=False) ---
    x_tokens = jax.random.normal(k1, (seq * batch, d_model), jnp.float32)
    w_down, b_down, w_up, b_up = init_adapter_params(k2, d_model, bottleneck)

    adapt_x = adapter_forward(x_tokens, w_down, b_down, w_up, b_up,
                              scale=0.1, add_residual=False)
    adapt_x_res = adapter_forward(x_tokens, w_down, b_down, w_up, b_up,
                                  scale=0.1, add_residual=True)
    # Exercise the explicit-residual path (different tensor), f32 compute/output dtype.
    other_res = jax.random.normal(k6, (seq * batch, d_model), jnp.float32)
    adapt_x_res2 = adapter_forward(x_tokens, w_down, b_down, w_up, b_up,
                                   scale=0.1, add_residual=True,
                                   residual=other_res,
                                   compute_dtype=jnp.float32,
                                   out_dtype=jnp.float32)
    # residual combine from the reference: x = attn(ln(x)) + adapt_x + residual
    x_after = x_tokens + adapt_x.astype(jnp.float32)   # (attention stood in by identity)

    # --- Logits head (tail of Base.forward) ---
    image_embeds = jax.random.normal(k3, (B, Q, D), jnp.float32)   # Qformer last_hidden_state
    text_features = jax.random.normal(k4, (L, D), jnp.float32)     # text_ft[0, :, :]
    text_ft = jax.random.normal(k5, (L, D), jnp.float32)           # fusion(...)[:, 0, :]

    logits = logits_head(image_embeds, text_features, text_ft, res_w=0.8, temp=0.07)

    jax.block_until_ready((adapt_x, adapt_x_res, adapt_x_res2, x_after, logits))

    assert adapt_x.shape == (seq * batch, d_model)
    assert adapt_x_res.shape == (seq * batch, d_model)
    assert adapt_x_res2.shape == (seq * batch, d_model)
    assert logits.shape == (B, L)
    assert bool(jnp.isfinite(adapt_x.astype(jnp.float32)).all())
    assert bool(jnp.isfinite(adapt_x_res2).all())
    assert bool(jnp.isfinite(logits).all())
    print("KERNEL_OK")
</pallas_src>

<mosaic_0001>
module attributes {stable_mosaic.version = 11 : i64} {
  func.func @_adapter_kernel(%arg0: i32, %arg1: memref<16x32xf32, #tpu.memory_space<vmem>>, %arg2: memref<32x128xbf16, #tpu.memory_space<vmem>>, %arg3: memref<1x128xf32, #tpu.memory_space<vmem>>, %arg4: memref<128x32xbf16, #tpu.memory_space<vmem>>, %arg5: memref<1x32xf32, #tpu.memory_space<vmem>>, %arg6: memref<16x32xbf16, #tpu.memory_space<vmem>>) attributes {dimension_semantics = [#tpu.dimension_semantics<parallel>], iteration_bounds = array<i64: 1>, scalar_prefetch = 0 : i64, scratch_operands = 0 : i64, tpu.core_type = #tpu.core_type<tc>, window_params = [{transform_indices = @transform_0, window_bounds = array<i64: 16, 32>}, {pipeline_mode = #tpu.pipeline_mode<synchronous>, transform_indices = @transform_1, window_bounds = array<i64: 32, 128>}, {pipeline_mode = #tpu.pipeline_mode<synchronous>, transform_indices = @transform_2, window_bounds = array<i64: 1, 128>}, {pipeline_mode = #tpu.pipeline_mode<synchronous>, transform_indices = @transform_3, window_bounds = array<i64: 128, 32>}, {pipeline_mode = #tpu.pipeline_mode<synchronous>, transform_indices = @transform_4, window_bounds = array<i64: 1, 32>}, {transform_indices = @transform_5, window_bounds = array<i64: 16, 32>}]} {
    %c0 = arith.constant 0 : index
    %c0_0 = arith.constant 0 : index
    %0 = vector.load %arg1[%c0, %c0_0] : memref<16x32xf32, #tpu.memory_space<vmem>>, vector<16x32xf32>
    %1 = arith.truncf %0 : vector<16x32xf32> to vector<16x32xbf16>
    %c0_1 = arith.constant 0 : index
    %c0_2 = arith.constant 0 : index
    %2 = vector.load %arg2[%c0_1, %c0_2] : memref<32x128xbf16, #tpu.memory_space<vmem>>, vector<32x128xbf16>
    %cst = arith.constant dense<0.000000e+00> : vector<16x128xf32>
    %3 = tpu.matmul %1, %2, %cst {dimension_numbers = #tpu.dot_dimension_numbers<[1], [0], [0], [1], [0, 0, 1, 1], [], []>} : vector<16x32xbf16>, vector<32x128xbf16>, vector<16x128xf32> -> vector<16x128xf32>
    %c0_3 = arith.constant 0 : index
    %c0_4 = arith.constant 0 : index
    %4 = vector.load %arg3[%c0_3, %c0_4] : memref<1x128xf32, #tpu.memory_space<vmem>>, vector<1x128xf32>
    %5 = vector.broadcast %4 : vector<1x128xf32> to vector<16x128xf32>
    %6 = arith.addf %3, %5 : vector<16x128xf32>
    %cst_5 = arith.constant 0.000000e+00 : f32
    %7 = vector.broadcast %cst_5 : f32 to vector<16x128xf32>
    %8 = arith.maximumf %6, %7 : vector<16x128xf32>
    %9 = arith.truncf %8 : vector<16x128xf32> to vector<16x128xbf16>
    %c0_6 = arith.constant 0 : index
    %c0_7 = arith.constant 0 : index
    %10 = vector.load %arg4[%c0_6, %c0_7] : memref<128x32xbf16, #tpu.memory_space<vmem>>, vector<128x32xbf16>
    %cst_8 = arith.constant dense<0.000000e+00> : vector<16x32xf32>
    %11 = tpu.matmul %9, %10, %cst_8 {dimension_numbers = #tpu.dot_dimension_numbers<[1], [0], [0], [1], [0, 0, 1, 1], [], []>} : vector<16x128xbf16>, vector<128x32xbf16>, vector<16x32xf32> -> vector<16x32xf32>
    %c0_9 = arith.constant 0 : index
    %c0_10 = arith.constant 0 : index
    %12 = vector.load %arg5[%c0_9, %c0_10] : memref<1x32xf32, #tpu.memory_space<vmem>>, vector<1x32xf32>
    %13 = vector.broadcast %12 : vector<1x32xf32> to vector<16x32xf32>
    %14 = arith.addf %11, %13 : vector<16x32xf32>
    %cst_11 = arith.constant 1.000000e-01 : f32
    %15 = vector.broadcast %cst_11 : f32 to vector<16x32xf32>
    %16 = arith.mulf %14, %15 : vector<16x32xf32>
    %17 = arith.truncf %16 : vector<16x32xf32> to vector<16x32xbf16>
    %c0_12 = arith.constant 0 : index
    %c0_13 = arith.constant 0 : index
    %18 = vector.load %arg6[%c0_12, %c0_13] : memref<16x32xbf16, #tpu.memory_space<vmem>>, vector<16x32xbf16>
    tpu.vector_store %arg6[%c0_12, %c0_13], %17 {strides = array<i32>} : memref<16x32xbf16, #tpu.memory_space<vmem>>, vector<16x32xbf16>,
    return
  }
  func.func @transform_0(%arg0: i32) -> (i32, i32) {
    %c0_i32 = arith.constant 0 : i32
    %c0_i32_0 = arith.constant 0 : i32
    return %arg0, %c0_i32 : i32, i32
  }
  func.func @transform_1(%arg0: i32) -> (i32, i32) {
    %c0_i32 = arith.constant 0 : i32
    %c0_i32_0 = arith.constant 0 : i32
    %c0_i32_1 = arith.constant 0 : i32
    return %c0_i32, %c0_i32_0 : i32, i32
  }
  func.func @transform_2(%arg0: i32) -> (i32, i32) {
    %c0_i32 = arith.constant 0 : i32
    %c0_i32_0 = arith.constant 0 : i32
    %c0_i32_1 = arith.constant 0 : i32
    return %c0_i32, %c0_i32_0 : i32, i32
  }
  func.func @transform_3(%arg0: i32) -> (i32, i32) {
    %c0_i32 = arith.constant 0 : i32
    %c0_i32_0 = arith.constant 0 : i32
    %c0_i32_1 = arith.constant 0 : i32
    return %c0_i32, %c0_i32_0 : i32, i32
  }
  func.func @transform_4(%arg0: i32) -> (i32, i32) {
    %c0_i32 = arith.constant 0 : i32
    %c0_i32_0 = arith.constant 0 : i32
    %c0_i32_1 = arith.constant 0 : i32
    return %c0_i32, %c0_i32_0 : i32, i32
  }
  func.func @transform_5(%arg0: i32) -> (i32, i32) {
    %c0_i32 = arith.constant 0 : i32
    %c0_i32_0 = arith.constant 0 : i32
    return %arg0, %c0_i32 : i32, i32
  }
}

</mosaic_0001>

<llo_original>
// kernel: tpu_custom_call.1
$region0: #{tpu_custom_call.1}
  #allocation0 [shape = 'u32[]', space=smem, size = 0x4, offset = 0x4, fixed_abs, tag = 'smem constant byte address 0x4 - core index']
  #allocation1 [shape = 'u32[144,128]{1,0:T(1,128)}', space=vmem, size = 0x12000, scoped, tag = 'internal scratch']
  %s0 = inlined_call_operand.hbm [shape: f32[16,32], index: 0, kind: input, shape index: {}]
  %s1 = inlined_call_operand.hbm [shape: bf16[32,128], index: 1, kind: input, shape index: {}]
  %s2 = inlined_call_operand.hbm [shape: f32[1,128], index: 2, kind: input, shape index: {}]
  %s3 = inlined_call_operand.hbm [shape: bf16[128,32], index: 3, kind: input, shape index: {}]
  %s4 = inlined_call_operand.hbm [shape: f32[1,32], index: 4, kind: input, shape index: {}]
  %s5 = inlined_call_operand.hbm [shape: bf16[16,32], index: 5, kind: output, shape index: {}]
  %s6 = sld [smem:[#allocation0]]
  $region50: #{tpu_custom_call.1} parent=0
    _
  %s8 = ssub.s32 1, %s6
  %s9 = scalar_select 0, %s8, %s6
  $region1: #{tpu_custom_call.1} parent=0
    #allocation2 [shape = 'u8[8192]{0}', space=vmem, size = 0x2000, scoped, tag = 'input window, operand 0, single buffered']
    #allocation3 [shape = 's32[1]{0}', space=sflag, size = 0x4, scoped, tag = 'scoped memory for tpu_custom_call.1']
    #allocation4 [shape = 's32[1]{0}', space=sflag, size = 0x4, scoped, tag = 'scoped memory for tpu_custom_call.1']
    #allocation5 [shape = 'u8[8192]{0}', space=vmem, size = 0x2000, scoped, tag = 'input window, operand 1, single buffered']
    #allocation6 [shape = 's32[1]{0}', space=sflag, size = 0x4, scoped, tag = 'scoped memory for tpu_custom_call.1']
    #allocation7 [shape = 'u8[512]{0}', space=vmem, size = 0x400, scoped, tag = 'input window, operand 2, single buffered']
    #allocation8 [shape = 'u8[32768]{0}', space=vmem, size = 0x8000, scoped, tag = 'input window, operand 3, single buffered']
    #allocation9 [shape = 's32[1]{0}', space=sflag, size = 0x4, scoped, tag = 'scoped memory for tpu_custom_call.1']
    #allocation10 [shape = 'u8[512]{0}', space=vmem, size = 0x400, scoped, tag = 'input window, operand 4, single buffered']
    #allocation11 [shape = 'u8[4096]{0}', space=vmem, size = 0x1000, scoped, tag = 'output window, operand 0, single buffered']
    %10 = vsyncpa [#allocation3], 0
    %11 = vsyncpa [#allocation6], 0
    %12 = vsyncpa [#allocation9], 0
    %13 = vsyncpa [#allocation4], 0
    // Predicated region
    $region2: #{tpu_custom_call.1} parent=1 // pred_check
      _
    $region3: #{tpu_custom_call.1} parent=1 // pred_check_branch
      %15 = sbr.rel (0) target = $region5
    $region4: #{tpu_custom_call.1} parent=1 // pred_region
      %s17 = ssub.s32 256, 256
      %18 = vsyncadd [#allocation3], %s17
      %s19 = sshll.u32 [#allocation2], 4
      %s20 = int_to_ptr.vmem [resolvable:$true] %s19
      %25 = dma.hbm_to_vmem [thread:$0]  %s0, 256, %s20, [#allocation3], 128, 128, 8
    $region5: #{tpu_custom_call.1} parent=1 // pred_fallthru
      _
    // Predicated region
    $region6: #{tpu_custom_call.1} parent=1 // pred_check
      _
    $region7: #{tpu_custom_call.1} parent=1 // pred_check_branch
      %27 = sbr.rel (0) target = $region9
    $region8: #{tpu_custom_call.1} parent=1 // pred_region
      %s29 = ssub.s32 256, 256
      %30 = vsyncadd [#allocation6], %s29
      %s31 = sshll.u32 [#allocation5], 4
      %s32 = int_to_ptr.vmem [resolvable:$true] %s31
      %37 = dma.hbm_to_vmem [thread:$0]  %s1, 256, %s32, [#allocation6], 64, 64, 4
    $region9: #{tpu_custom_call.1} parent=1 // pred_fallthru
      _
    // Predicated region
    $region10: #{tpu_custom_call.1} parent=1 // pred_check
      _
    $region11: #{tpu_custom_call.1} parent=1 // pred_check_branch
      %39 = sbr.rel (0) target = $region13
    $region12: #{tpu_custom_call.1} parent=1 // pred_region
      %s41 = ssub.s32 16, 16
      %42 = vsyncadd [#allocation6], %s41
      %s44 = sshll.u32 [#allocation7], 4
      %s45 = int_to_ptr.vmem [resolvable:$true] %s44
      %47 = dma.hbm_to_vmem [thread:$0]  %s2, 16, %s45, [#allocation6]
    $region13: #{tpu_custom_call.1} parent=1 // pred_fallthru
      _
    // Predicated region
    $region14: #{tpu_custom_call.1} parent=1 // pred_check
      _
    $region15: #{tpu_custom_call.1} parent=1 // pred_check_branch
      %49 = sbr.rel (0) target = $region17
    $region16: #{tpu_custom_call.1} parent=1 // pred_region
      %s51 = ssub.s32 1024, 1024
      %52 = vsyncadd [#allocation9], %s51
      %s53 = sshll.u32 [#allocation8], 4
      %s54 = int_to_ptr.vmem [resolvable:$true] %s53
      %59 = dma.hbm_to_vmem [thread:$0]  %s3, 1024, %s54, [#allocation9], 64, 64, 4
    $region17: #{tpu_custom_call.1} parent=1 // pred_fallthru
      _
    // Predicated region
    $region18: #{tpu_custom_call.1} parent=1 // pred_check
      _
    $region19: #{tpu_custom_call.1} parent=1 // pred_check_branch
      %61 = sbr.rel (0) target = $region21
    $region20: #{tpu_custom_call.1} parent=1 // pred_region
      %s63 = ssub.s32 16, 16
      %64 = vsyncadd [#allocation9], %s63
      %s66 = sshll.u32 [#allocation10], 4
      %s67 = int_to_ptr.vmem [resolvable:$true] %s66
      %69 = dma.hbm_to_vmem [thread:$0]  %s4, 16, %s67, [#allocation9]
    $region21: #{tpu_custom_call.1} parent=1 // pred_fallthru
      _
    // Predicated region
    $region22: #{tpu_custom_call.1} parent=1 // pred_check
      _
    $region23: #{tpu_custom_call.1} parent=1 // pred_check_branch
      %71 = sbr.rel (0) target = $region25
    $region24: #{tpu_custom_call.1} parent=1 // pred_region
      %72 = dma.done [#allocation3], 256
    $region25: #{tpu_custom_call.1} parent=1 // pred_fallthru
      _
    // Predicated region
    $region26: #{tpu_custom_call.1} parent=1 // pred_check
      _
    $region27: #{tpu_custom_call.1} parent=1 // pred_check_branch
      %74 = sbr.rel (0) target = $region29
    $region28: #{tpu_custom_call.1} parent=1 // pred_region
      %75 = dma.done [#allocation6], 256
    $region29: #{tpu_custom_call.1} parent=1 // pred_fallthru
      _
    // Predicated region
    $region30: #{tpu_custom_call.1} parent=1 // pred_check
      _
    $region31: #{tpu_custom_call.1} parent=1 // pred_check_branch
      %77 = sbr.rel (0) target = $region33
    $region32: #{tpu_custom_call.1} parent=1 // pred_region
      %78 = dma.done [#allocation6], 16
    $region33: #{tpu_custom_call.1} parent=1 // pred_fallthru
      _
    // Predicated region
    $region34: #{tpu_custom_call.1} parent=1 // pred_check
      _
    $region35: #{tpu_custom_call.1} parent=1 // pred_check_branch
      %80 = sbr.rel (0) target = $region37
    $region36: #{tpu_custom_call.1} parent=1 // pred_region
      %81 = dma.done [#allocation9], 1024
    $region37: #{tpu_custom_call.1} parent=1 // pred_fallthru
      _
    // Predicated region
    $region38: #{tpu_custom_call.1} parent=1 // pred_check
      _
    $region39: #{tpu_custom_call.1} parent=1 // pred_check_branch
      %83 = sbr.rel (0) target = $region41
    $region40: #{tpu_custom_call.1} parent=1 // pred_region
      %84 = dma.done [#allocation9], 16
    $region41: #{tpu_custom_call.1} parent=1 // pred_fallthru
      _
    %v86 = vld [vmem:[#allocation2] sm:$0xff]
    %v87 = vld [vmem:[#allocation2 + $0x8] sm:$0xff]
    %v88 = vpack.c.bf16 %v87, %v86
    %v89 = vld [vmem:[#allocation5] sm:$0xf]
    %v90 = vld [vmem:[#allocation5 + $0x4] sm:$0xf]
    %v91 = vld [vmem:[#allocation5 + $0x8] sm:$0xf]
    %v92 = vld [vmem:[#allocation5 + $0xc] sm:$0xf]
    %v93 = vld [vmem:[#allocation7] sm:$0x1]
    %v95 = vlaneseq
    %v96 = vshrl.u32 %v95, 7
    %v97 = vsub.s32 0, %v96
    %v98 = vrot.slane %v93, %v97
    %v104 = vunpack.c.l.b16 %v89
    %v105 = vunpack.c.l.b16 %v90
    %v106 = vunpack.c.l.b16 %v91
    %v107 = vunpack.c.l.b16 %v92
    %v108 = vpack.c.b16 %v105, %v104
    %v109 = vpack.c.b16 %v107, %v106
    %vm112 = vcmask 261120
    %v114 = vsel %vm112, %v88, 0
    %116 = vmatprep.subr.bf16.mxu0 0
    %117 = vmatpush1.bf16.msra.mxu0 %v108
    %118 = vmatprep.subr.bf16.mxu0 0
    %119 = vmatpush1.bf16.msra.mxu0 %v109
    %120 = vmatprep.subr.bf16.mxu0 0
    %121 = vmatpush1.bf16.msra.mxu0 0
    %122 = vmatprep.subr.bf16.mxu0 0
    %123 = vmatpush1.bf16.msra.mxu0 0
    %124 = vmatprep.subr.bf16.mxu0 0
    %125 = vmatpush1.bf16.msra.mxu0 0
    %126 = vmatprep.subr.bf16.mxu0 0
    %127 = vmatpush1.bf16.msra.mxu0 0
    %128 = vmatprep.subr.bf16.mxu0 0
    %129 = vmatpush1.bf16.msra.mxu0 0
    %130 = vmatprep.subr.bf16.mxu0 0
    %131 = vmatpush1.bf16.msra.mxu0 0
    %132 = vmatprep.subr.bf16.mxu0 0
    %133 = vmatpush1.bf16.msra.mxu0 0
    %134 = vmatprep.subr.bf16.mxu0 0
    %135 = vmatpush1.bf16.msra.mxu0 0
    %136 = vmatprep.subr.bf16.mxu0 0
    %137 = vmatpush1.bf16.msra.mxu0 0
    %138 = vmatprep.subr.bf16.mxu0 0
    %139 = vmatpush1.bf16.msra.mxu0 0
    %140 = vmatprep.subr.bf16.mxu0 0
    %141 = vmatpush1.bf16.msra.mxu0 0
    %142 = vmatprep.subr.bf16.mxu0 0
    %143 = vmatpush1.bf16.msra.mxu0 0
    %144 = vmatprep.subr.bf16.mxu0 0
    %145 = vmatpush1.bf16.msra.mxu0 0
    %146 = vmatprep.subr.bf16.mxu0 0
    %147 = vmatpush1.bf16.msra.mxu0 0
    %148 = vmatprep.mubr.bf16.mxu0 0
    %149 = vmatmul.mubr.bf16.gmra.mrb[0].mxu0 %v114
    %v150 = vpop.f32.mrb[0].mxu0
    %v151 = vadd.f32 %v98, %v150
    %v152 = vpop.f32.mrb[0].mxu0
    %v153 = vpop.f32.mrb[0].mxu0
    %v154 = vadd.f32 %v98, %v153
    %v155 = vpop.f32.mrb[0].mxu0
    %156 = vdwg.mxu0
    %v157 = vmax.f32 %v151, 0.0
    %v158 = vmax.f32 %v154, 0.0
    %v159 = vpack.c.bf16 %v158, %v157
    %v160 = vld [vmem:[#allocation8] sm:$0xf]
    %v161 = vld [vmem:[#allocation8 + $0x4] sm:$0xf]
    %v162 = vld [vmem:[#allocation8 + $0x8] sm:$0xf]
    %v163 = vld [vmem:[#allocation8 + $0xc] sm:$0xf]
    %v164 = vld [vmem:[#allocation8 + $0x10] sm:$0xf]
    %v165 = vld [vmem:[#allocation8 + $0x14] sm:$0xf]
    %v166 = vld [vmem:[#allocation8 + $0x18] sm:$0xf]
    %v167 = vld [vmem:[#allocation8 + $0x1c] sm:$0xf]
    %v168 = vld [vmem:[#allocation8 + $0x20] sm:$0xf]
    %v169 = vld [vmem:[#allocation8 + $0x24] sm:$0xf]
    %v170 = vld [vmem:[#allocation8 + $0x28] sm:$0xf]
    %v171 = vld [vmem:[#allocation8 + $0x2c] sm:$0xf]
    %v172 = vld [vmem:[#allocation8 + $0x30] sm:$0xf]
    %v173 = vld [vmem:[#allocation8 + $0x34] sm:$0xf]
    %v174 = vld [vmem:[#allocation8 + $0x38] sm:$0xf]
    %v175 = vld [vmem:[#allocation8 + $0x3c] sm:$0xf]
    %v176 = vld [vmem:[#allocation10] sm:$0x1]
    %v178 = vlaneseq
    %v179 = vshrl.u32 %v178, 7
    %v180 = vsub.s32 0, %v179
    %v181 = vrot.slane %v176, %v180
    %v199 = vunpack.c.l.b16 %v160
    %v200 = vunpack.c.l.b16 %v161
    %v201 = vunpack.c.l.b16 %v162
    %v202 = vunpack.c.l.b16 %v163
    %v203 = vunpack.c.l.b16 %v164
    %v204 = vunpack.c.l.b16 %v165
    %v205 = vunpack.c.l.b16 %v166
    %v206 = vunpack.c.l.b16 %v167
    %v207 = vunpack.c.l.b16 %v168
    %v208 = vunpack.c.l.b16 %v169
    %v209 = vunpack.c.l.b16 %v170
    %v210 = vunpack.c.l.b16 %v171
    %v211 = vunpack.c.l.b16 %v172
    %v212 = vunpack.c.l.b16 %v173
    %v213 = vunpack.c.l.b16 %v174
    %v214 = vunpack.c.l.b16 %v175
    %v215 = vpack.c.b16 %v200, %v199
    %v216 = vpack.c.b16 %v202, %v201
    %v217 = vpack.c.b16 %v204, %v203
    %v218 = vpack.c.b16 %v206, %v205
    %v219 = vpack.c.b16 %v208, %v207
    %v220 = vpack.c.b16 %v210, %v209
    %v221 = vpack.c.b16 %v212, %v211
    %v222 = vpack.c.b16 %v214, %v213
    %231 = vmatprep.subr.bf16.mxu0 0
    %232 = vmatpush1.bf16.msra.mxu0 %v215
    %233 = vmatprep.subr.bf16.mxu0 0
    %234 = vmatpush1.bf16.msra.mxu0 %v216
    %235 = vmatprep.subr.bf16.mxu0 0
    %236 = vmatpush1.bf16.msra.mxu0 %v217
    %237 = vmatprep.subr.bf16.mxu0 0
    %238 = vmatpush1.bf16.msra.mxu0 %v218
    %239 = vmatprep.subr.bf16.mxu0 0
    %240 = vmatpush1.bf16.msra.mxu0 %v219
    %241 = vmatprep.subr.bf16.mxu0 0
    %242 = vmatpush1.bf16.msra.mxu0 %v220
    %243 = vmatprep.subr.bf16.mxu0 0
    %244 = vmatpush1.bf16.msra.mxu0 %v221
    %245 = vmatprep.subr.bf16.mxu0 0
    %246 = vmatpush1.bf16.msra.mxu0 %v222
    %247 = vmatprep.subr.bf16.mxu0 0
    %248 = vmatpush1.bf16.msra.mxu0 0
    %249 = vmatprep.subr.bf16.mxu0 0
    %250 = vmatpush1.bf16.msra.mxu0 0
    %251 = vmatprep.subr.bf16.mxu0 0
    %252 = vmatpush1.bf16.msra.mxu0 0
    %253 = vmatprep.subr.bf16.mxu0 0
    %254 = vmatpush1.bf16.msra.mxu0 0
    %255 = vmatprep.subr.bf16.mxu0 0
    %256 = vmatpush1.bf16.msra.mxu0 0
    %257 = vmatprep.subr.bf16.mxu0 0
    %258 = vmatpush1.bf16.msra.mxu0 0
    %259 = vmatprep.subr.bf16.mxu0 0
    %260 = vmatpush1.bf16.msra.mxu0 0
    %261 = vmatprep.subr.bf16.mxu0 0
    %262 = vmatpush1.bf16.msra.mxu0 0
    %263 = vmatprep.mubr.bf16.mxu0 0
    %264 = vmatmul.mubr.bf16.gmra.mrb[0].mxu0 %v159
    %v265 = vpop.f32.mrb[0].mxu0
    %v266 = vadd.f32 %v181, %v265
    %v267 = vpop.f32.mrb[0].mxu0
    %v268 = vpop.f32.mrb[0].mxu0
    %v269 = vadd.f32 %v181, %v268
    %v270 = vpop.f32.mrb[0].mxu0
    %271 = vdwg.mxu0
    %v272 = vmul.f32 %v266, 0.1
    %v273 = vmul.f32 %v269, 0.1
    %v274 = vpack.c.bf16 %v273, %v272
    %v276 = vunpack.c.l.b16 %v274
    %v277 = vunpack.c.h.b16 %v274
    %v278 = vpack.c.b16 %v276, %v276
    %v279 = vpack.c.b16 %v277, %v277
    %vm282 = vcmask 257024
    %283 = vst.msk [vmem:[#allocation11] sm:$0xf] %vm282, %v278
    %284 = vst.msk [vmem:[#allocation11 + $0x4] sm:$0xf] %vm282, %v279
    // Predicated region
    $region42: #{tpu_custom_call.1} parent=1 // pred_check
      _
    $region43: #{tpu_custom_call.1} parent=1 // pred_check_branch
      %286 = sbr.rel (0) target = $region45
    $region44: #{tpu_custom_call.1} parent=1 // pred_region
      %s288 = ssub.s32 128, 128
      %289 = vsyncadd [#allocation4], %s288
      %s290 = sshll.u32 [#allocation11], 4
      %s291 = int_to_ptr.vmem [resolvable:$true] %s290
      %296 = dma.vmem_to_hbm [thread:$0]  %s291, 128, %s5, [#allocation4], 64, 64, 4
    $region45: #{tpu_custom_call.1} parent=1 // pred_fallthru
      _
    // Predicated region
    $region46: #{tpu_custom_call.1} parent=1 // pred_check
      _
    $region47: #{tpu_custom_call.1} parent=1 // pred_check_branch
      %298 = sbr.rel (0) target = $region49
    $region48: #{tpu_custom_call.1} parent=1 // pred_region
      %299 = dma.done [#allocation4], 128
    $region49: #{tpu_custom_call.1} parent=1 // pred_fallthru
      _
    %300 = vsyncpa [#allocation3], 1
    %301 = vsyncpa [#allocation6], 1
    %302 = vsyncpa [#allocation9], 1
    %303 = vsyncpa [#allocation4], 1

</llo_original>
